<compile_context>
chip_gen: v7x
topology: tpu7x:2x2x1
jax: 0.10.0
libtpu: 0.0.40
codegen_flags: <defaults>
</compile_context>

<pallas_src>
import math
import functools

import jax
import jax.numpy as jnp
from jax import lax
from jax.experimental import pallas as pl
from jax.experimental.pallas import tpu as pltpu


# Contract the last (K) dim of the x tile (tm, tk) with the last (K) dim of
# the weight tile (tn, tk) -> (tm, tn).  Consumes the PyTorch (d_out, d_in)
# weight layout directly.
_TRANS_B_DIMS = (((1,), (1,)), ((), ()))


# ----------------------------- kernels ------------------------------------ #

def _kernel_single_k(x_ref, w_ref, o_ref):
    """Whole K fits in one block: write the output tile directly."""
    o_ref[...] = lax.dot_general(
        x_ref[...], w_ref[...], _TRANS_B_DIMS,
        preferred_element_type=jnp.float32,
    ).astype(o_ref.dtype)


def _kernel_multi_k_f32_out(x_ref, w_ref, o_ref):
    """f32 output: accumulate straight into the resident output block.

    Saves a (tm, tn) f32 scratch plus the final copy (the VMEM saving matters
    most on v7x, which only has 64 MiB physical VMEM).
    """
    @pl.when(pl.program_id(2) == 0)
    def _():
        o_ref[...] = jnp.zeros_like(o_ref)

    o_ref[...] += lax.dot_general(
        x_ref[...], w_ref[...], _TRANS_B_DIMS,
        preferred_element_type=jnp.float32,
    )


def _kernel_multi_k_acc(x_ref, w_ref, o_ref, acc_ref):
    """Low-precision output: resident f32 accumulator, cast on the last K step."""
    @pl.when(pl.program_id(2) == 0)
    def _():
        acc_ref[...] = jnp.zeros_like(acc_ref)

    acc_ref[...] += lax.dot_general(
        x_ref[...], w_ref[...], _TRANS_B_DIMS,
        preferred_element_type=jnp.float32,
    )

    @pl.when(pl.program_id(2) == pl.num_programs(2) - 1)
    def _():
        o_ref[...] = acc_ref[...].astype(o_ref.dtype)


# --------------------------- tile heuristics ------------------------------- #

def _round_up(v, m):
    return ((v + m - 1) // m) * m


def _sublane(dtype):
    # bf16/f16 pack 16 rows per vreg; f32 packs 8.
    return 16 if jnp.dtype(dtype).itemsize == 2 else 8


def _lane_tile(dim, cap):
    """Lane-dim tile: whole (128-padded) dim if it fits under `cap`; else an
    exact >=256 divisor; else the fewest near-equal 128-aligned chunks <= cap
    (pad-to-tile beats collapsing to 128-wide tiles)."""
    d = _round_up(dim, 128)
    if d <= cap:
        return d
    for c in (cap, 512, 256):
        if c <= cap and d % c == 0:
            return c
    n_chunks = -(-d // cap)
    return min(cap, _round_up(-(-d // n_chunks), 128))


def _m_tile(M, cap, sub):
    """Sublane-dim tile: whole (sublane-rounded) M if it fits under `cap`;
    else the fewest near-equal sublane-aligned chunks <= cap."""
    m_r = _round_up(M, sub)
    if m_r <= cap:
        return m_r
    n_chunks = -(-m_r // cap)
    return _round_up(-(-m_r // n_chunks), sub)


def _select_tiles(M, d_in, d_out, dtype):
    sub = _sublane(dtype)
    gemv = M <= 64                          # decode / GEMV regime
    big = (M >= 2048) and (d_out >= 1024)   # large-GEMM regime

    tm_cap = 1024 if big else 512
    tn_cap = 1024 if big else 512
    tk_cap = 1024 if (gemv and d_in >= 1024) else 512

    tn = _lane_tile(d_out, tn_cap)
    tk = _lane_tile(d_in, tk_cap)
    tm = _m_tile(M, tm_cap, sub)

    # v7x megacore: keep at least 2 iterations on a parallel grid axis when
    # the M axis collapses to a single step (GEMV / small batch).
    if _round_up(M, tm) // tm == 1:
        while tn >= 512 and tn % 256 == 0 and _round_up(d_out, tn) // tn < 2:
            tn //= 2

    return tm, tn, tk


# --------------------------- pallas_call core ------------------------------ #

def _padded_linear(x2d, w, *, tm, tn, tk, out_dtype, weight_buffers=None):
    """GEMM on already-padded operands.

    x2d: (M_p, K_p), w: (N_p, K_p) in the PyTorch (d_out, d_in) layout; every
    dim is a multiple of its tile.  Returns (M_p, N_p) in `out_dtype`.
    """
    M_p, K_p = x2d.shape
    N_p, K_p2 = w.shape
    assert K_p == K_p2

    grid_m, grid_n, grid_k = M_p // tm, N_p // tn, K_p // tk

    # Optional deeper buffering of the weight stream (GEMV/decode regime).
    if weight_buffers is None:
        w_spec = pl.BlockSpec((tn, tk), lambda i, j, k: (j, k))
    else:
        w_spec = pl.BlockSpec((tn, tk), lambda i, j, k: (j, k),
                              pipeline_mode=pl.Buffered(weight_buffers))

    in_itemsize = jnp.dtype(x2d.dtype).itemsize
    w_itemsize = jnp.dtype(w.dtype).itemsize
    out_itemsize = jnp.dtype(out_dtype).itemsize

    if grid_k == 1:
        kernel = _kernel_single_k
        scratch_shapes = []
    elif jnp.dtype(out_dtype) == jnp.dtype(jnp.float32):
        kernel = _kernel_multi_k_f32_out
        scratch_shapes = []
    else:
        kernel = _kernel_multi_k_acc
        scratch_shapes = [pltpu.VMEM((tm, tn), jnp.float32)]

    # VMEM footprint: double-buffered inputs/outputs (+ deeper weight buffers)
    # + optional f32 accumulator.  Clamp the limit to [32 MiB, 56 MiB] so it
    # is >= every generation's default scoped limit yet stays well under
    # v7x's 64 MiB physical VMEM.
    n_wbuf = 2 if weight_buffers is None else max(2, weight_buffers)
    vmem_bytes = (2 * tm * tk * in_itemsize
                  + n_wbuf * tn * tk * w_itemsize
                  + 2 * tm * tn * out_itemsize
                  + (tm * tn * 4 if scratch_shapes else 0))
    vmem_limit = int(min(max(32 * 1024 * 1024, int(1.5 * vmem_bytes)),
                         56 * 1024 * 1024))

    # Actual HBM traffic includes the K-loop re-streaming: W is refetched once
    # per M-tile and X once per N-tile.
    cost = pl.CostEstimate(
        flops=2 * M_p * K_p * N_p,
        transcendentals=0,
        bytes_accessed=(grid_m * N_p * K_p * w_itemsize
                        + grid_n * M_p * K_p * in_itemsize
                        + M_p * N_p * out_itemsize),
    )

    return pl.pallas_call(
        kernel,
        out_shape=jax.ShapeDtypeStruct((M_p, N_p), out_dtype),
        grid_spec=pltpu.PrefetchScalarGridSpec(
            num_scalar_prefetch=0,
            grid=(grid_m, grid_n, grid_k),
            in_specs=[
                pl.BlockSpec((tm, tk), lambda i, j, k: (i, k)),   # activations
                w_spec,                                           # weight (d_out, d_in)
            ],
            out_specs=pl.BlockSpec((tm, tn), lambda i, j, k: (i, j)),
            scratch_shapes=scratch_shapes,
        ),
        compiler_params=pltpu.CompilerParams(
            dimension_semantics=("parallel", "parallel", "arbitrary"),
            vmem_limit_bytes=vmem_limit,
        ),
        cost_estimate=cost,
    )(x2d, w)


# --------------------------- functional wrapper ----------------------------- #

@functools.partial(jax.jit, static_argnames=("tm", "tn", "tk", "weight_buffers"))
def linear_forward(x, weight, *, tm=None, tn=None, tk=None, weight_buffers=None):
    """y = einsum('...i,oi->...o', x, weight) with weight of shape (d_out, d_in).

    Convenience path: pads operands per call if needed.  On the hot path use
    `PallasLinear`, which caches the padded weight at init (avoids a full
    weight HBM round trip per call).
    """
    d_out, d_in = weight.shape
    *lead, d_in_x = x.shape
    assert d_in_x == d_in
    M = int(math.prod(lead)) if lead else 1

    out_dtype = jnp.result_type(x.dtype, weight.dtype)

    a_tm, a_tn, a_tk = _select_tiles(M, d_in, d_out, out_dtype)
    tm = a_tm if tm is None else tm
    tn = a_tn if tn is None else tn
    tk = a_tk if tk is None else tk

    M_p = _round_up(M, tm)
    K_p = _round_up(d_in, tk)
    N_p = _round_up(d_out, tn)

    x2d = x.reshape(M, d_in).astype(out_dtype)
    if (M_p, K_p) != (M, d_in):
        x2d = jnp.pad(x2d, ((0, M_p - M), (0, K_p - d_in)))
    w = weight.astype(out_dtype)
    if (N_p, K_p) != (d_out, d_in):
        w = jnp.pad(w, ((0, N_p - d_out), (0, K_p - d_in)))

    out = _padded_linear(x2d, w, tm=tm, tn=tn, tk=tk,
                         out_dtype=out_dtype, weight_buffers=weight_buffers)
    if (M_p, N_p) != (M, d_out):
        out = out[:M, :d_out]
    return out.reshape(*lead, d_out)


# ------------------------------ module class ------------------------------- #

@functools.partial(jax.jit, static_argnames=("d_in", "d_out", "tn", "tk"))
def _class_forward(x, w_padded, *, d_in, d_out, tn, tk):
    *lead, d_in_x = x.shape
    assert d_in_x == d_in
    M = int(math.prod(lead)) if lead else 1
    out_dtype = w_padded.dtype

    tm_cap = 1024 if (M >= 2048 and d_out >= 1024) else 512
    tm = _m_tile(M, tm_cap, _sublane(out_dtype))

    M_p = _round_up(M, tm)
    N_p, K_p = w_padded.shape

    x2d = x.reshape(M, d_in).astype(out_dtype)
    if (M_p, K_p) != (M, d_in):
        x2d = jnp.pad(x2d, ((0, M_p - M), (0, K_p - d_in)))

    out = _padded_linear(x2d, w_padded, tm=tm, tn=tn, tk=tk, out_dtype=out_dtype)
    if (M_p, N_p) != (M, d_out):
        out = out[:M, :d_out]
    return out.reshape(*lead, d_out)


def init_linear_weight(key, in_features, out_features, dtype=jnp.float32):
    """trunc_normal_(mean=0, std=sigma, a=-3*sigma, b=3*sigma), sigma=sqrt(2/(fi+fo))."""
    sigma = math.sqrt(2.0 / (in_features + out_features))
    w = jax.random.truncated_normal(
        key, lower=-3.0, upper=3.0, shape=(out_features, in_features),
        dtype=jnp.float32) * sigma
    return w.astype(dtype)


class PallasLinear:
    """Pallas-TPU port of the reference `Linear` module (no bias).

    The (d_out, d_in) weight is zero-padded to the chosen tile multiples once
    at construction (and cast to `dtype`), so the jitted forward never pads,
    casts or transposes the weight in HBM.
    """

    def __init__(self, key, in_features, out_features, dtype=jnp.float32,
                 batch_hint=512):
        self.in_features = int(in_features)
        self.out_features = int(out_features)
        self.dtype = jnp.dtype(dtype)

        # Tiles for the weight dims are fixed at init (batch_hint only sizes
        # the expected M regime); the M tile is re-derived per call.
        _, self.tn, self.tk = _select_tiles(
            batch_hint, self.in_features, self.out_features, self.dtype)
        K_p = _round_up(self.in_features, self.tk)
        N_p = _round_up(self.out_features, self.tn)

        w = init_linear_weight(key, self.in_features, self.out_features,
                               dtype=jnp.float32)
        if (N_p, K_p) != (self.out_features, self.in_features):
            w = jnp.pad(w, ((0, N_p - self.out_features),
                            (0, K_p - self.in_features)))
        self.weight = w.astype(self.dtype)        # (N_p, K_p), cached padded

    @property
    def unpadded_weight(self):
        return self.weight[:self.out_features, :self.in_features]

    def __call__(self, x):
        return _class_forward(x, self.weight,
                              d_in=self.in_features, d_out=self.out_features,
                              tn=self.tn, tk=self.tk)


# ---------------------------------- demo ----------------------------------- #

if __name__ == "__main__":
    key = jax.random.PRNGKey(0)
    k1, k2, k3, k4, kx1, kx2, kx3, kx4 = jax.random.split(key, 8)

    # 1) Module path, f32, aligned shapes -> single-K fast path, no padding.
    lin1 = PallasLinear(k1, in_features=256, out_features=128)
    x1 = jax.random.normal(kx1, (2, 8, 256), jnp.float32)
    y1 = jax.block_until_ready(lin1(x1))
    ref1 = jnp.einsum("...i,oi->...o", x1, lin1.unpadded_weight)
    assert y1.shape == (2, 8, 128)
    assert jnp.allclose(y1, ref1, atol=2e-2, rtol=2e-2)

    # 2) Functional path, f32, forced tk=128 -> multi-K with direct f32
    #    accumulation into the output block + ragged d_out (192 -> 256 tile).
    w2 = init_linear_weight(k2, 384, 192)
    x2 = jax.random.normal(kx2, (4, 8, 384), jnp.float32)
    y2 = jax.block_until_ready(linear_forward(x2, w2, tk=128))
    ref2 = jnp.einsum("...i,oi->...o", x2, w2)
    assert y2.shape == (4, 8, 192)
    assert jnp.allclose(y2, ref2, atol=2e-2, rtol=2e-2)

    # 3) bf16 path, forced tk=128 -> multi-K with f32 scratch accumulator and
    #    16-row sublane tiles.
    w3 = init_linear_weight(k3, 256, 128, dtype=jnp.bfloat16)
    x3 = jax.random.normal(kx3, (2, 8, 256), jnp.bfloat16)
    y3 = jax.block_until_ready(linear_forward(x3, w3, tk=128))
    ref3 = jnp.einsum("...i,oi->...o", x3.astype(jnp.float32),
                      w3.astype(jnp.float32))
    assert y3.shape == (2, 8, 128)
    assert y3.dtype == jnp.bfloat16
    assert jnp.allclose(y3.astype(jnp.float32), ref3, atol=1e-1, rtol=1e-1)

    # 4) Module path with bf16 params consuming f32 activations (wrapper cast)
    #    and a cached, padded weight (d_out 192 -> 256).
    lin4 = PallasLinear(k4, in_features=256, out_features=192,
                        dtype=jnp.bfloat16)
    x4 = jax.random.normal(kx4, (2, 8, 256), jnp.float32)
    y4 = jax.block_until_ready(lin4(x4))
    ref4 = jnp.einsum("...i,oi->...o",
                      x4.astype(jnp.bfloat16).astype(jnp.float32),
                      lin4.unpadded_weight.astype(jnp.float32))
    assert y4.shape == (2, 8, 192)
    assert y4.dtype == jnp.bfloat16
    assert jnp.allclose(y4.astype(jnp.float32), ref4, atol=1e-1, rtol=1e-1)

    print("KERNEL_OK")
</pallas_src>

<mosaic_0001>
module attributes {stable_mosaic.version = 11 : i64} {
  func.func @_kernel_single_k(%arg0: i32, %arg1: i32, %arg2: i32, %arg3: memref<16x256xf32, #tpu.memory_space<vmem>>, %arg4: memref<128x256xf32, #tpu.memory_space<vmem>>, %arg5: memref<16x128xf32, #tpu.memory_space<vmem>>) attributes {dimension_semantics = [#tpu.dimension_semantics<parallel>, #tpu.dimension_semantics<parallel>, #tpu.dimension_semantics<arbitrary>], iteration_bounds = array<i64: 1, 1, 1>, scalar_prefetch = 0 : i64, scratch_operands = 0 : i64, tpu.core_type = #tpu.core_type<tc>, window_params = [{transform_indices = @transform_0, window_bounds = array<i64: 16, 256>}, {transform_indices = @transform_1, window_bounds = array<i64: 128, 256>}, {transform_indices = @transform_2, window_bounds = array<i64: 16, 128>}]} {
    %c0 = arith.constant 0 : index
    %c0_0 = arith.constant 0 : index
    %0 = vector.load %arg3[%c0, %c0_0] : memref<16x256xf32, #tpu.memory_space<vmem>>, vector<16x256xf32>
    %c0_1 = arith.constant 0 : index
    %c0_2 = arith.constant 0 : index
    %1 = vector.load %arg4[%c0_1, %c0_2] : memref<128x256xf32, #tpu.memory_space<vmem>>, vector<128x256xf32>
    %cst = arith.constant dense<0.000000e+00> : vector<16x128xf32>
    %2 = tpu.matmul %0, %1, %cst {dimension_numbers = #tpu.dot_dimension_numbers<[1], [1], [0], [0], [0, 0, 1, 0], [], []>} : vector<16x256xf32>, vector<128x256xf32>, vector<16x128xf32> -> vector<16x128xf32>
    %c0_3 = arith.constant 0 : index
    %c0_4 = arith.constant 0 : index
    %3 = vector.load %arg5[%c0_3, %c0_4] : memref<16x128xf32, #tpu.memory_space<vmem>>, vector<16x128xf32>
    tpu.vector_store %arg5[%c0_3, %c0_4], %2 {strides = array<i32>} : memref<16x128xf32, #tpu.memory_space<vmem>>, vector<16x128xf32>,
    return
  }
  func.func @transform_0(%arg0: i32, %arg1: i32, %arg2: i32) -> (i32, i32) {
    %c0_i32 = arith.constant 0 : i32
    return %arg0, %arg2 : i32, i32
  }
  func.func @transform_1(%arg0: i32, %arg1: i32, %arg2: i32) -> (i32, i32) {
    %c0_i32 = arith.constant 0 : i32
    return %arg1, %arg2 : i32, i32
  }
  func.func @transform_2(%arg0: i32, %arg1: i32, %arg2: i32) -> (i32, i32) {
    %c0_i32 = arith.constant 0 : i32
    return %arg0, %arg1 : i32, i32
  }
}

</mosaic_0001>

<llo_original>
// kernel: _class_forward.1
$region0: #{_class_forward.1}
  #allocation0 [shape = 'u32[]', space=smem, size = 0x4, offset = 0x4, fixed_abs, tag = 'smem constant byte address 0x4 - core index']
  #allocation1 [shape = 'u32[144,128]{1,0:T(1,128)}', space=vmem, size = 0x12000, scoped, tag = 'internal scratch']
  %s0 = inlined_call_operand.hbm [shape: f32[16,256], index: 0, kind: input, shape index: {}]
  %s1 = inlined_call_operand.hbm [shape: f32[128,256], index: 1, kind: input, shape index: {}]
  %s2 = inlined_call_operand.hbm [shape: f32[16,128], index: 2, kind: output, shape index: {}]
  %s3 = sld [smem:[#allocation0]]
  $region26: #{_class_forward.1} parent=0
    _
  %s5 = ssub.s32 1, %s3
  %s6 = scalar_select 0, %s5, %s3
  $region1: #{_class_forward.1} parent=0
    #allocation2 [shape = 'u8[16384]{0}', space=vmem, size = 0x4000, scoped, tag = 'input window, operand 0, single buffered']
    #allocation3 [shape = 's32[1]{0}', space=sflag, size = 0x4, scoped, tag = 'scoped memory for _class_forward.1']
    #allocation4 [shape = 's32[1]{0}', space=sflag, size = 0x4, scoped, tag = 'scoped memory for _class_forward.1']
    #allocation5 [shape = 'u8[131072]{0}', space=vmem, size = 0x20000, scoped, tag = 'input window, operand 1, single buffered']
    #allocation6 [shape = 's32[1]{0}', space=sflag, size = 0x4, scoped, tag = 'scoped memory for _class_forward.1']
    #allocation7 [shape = 'u8[8192]{0}', space=vmem, size = 0x2000, scoped, tag = 'output window, operand 0, single buffered']
    %7 = vsyncpa [#allocation3], 0
    %8 = vsyncpa [#allocation6], 0
    %9 = vsyncpa [#allocation4], 0
    // Predicated region
    $region2: #{_class_forward.1} parent=1 // pred_check
      _
    $region3: #{_class_forward.1} parent=1 // pred_check_branch
      %11 = sbr.rel (0) target = $region5
    $region4: #{_class_forward.1} parent=1 // pred_region
      %s13 = ssub.s32 512, 512
      %14 = vsyncadd [#allocation3], %s13
      %s15 = sshll.u32 [#allocation2], 4
      %s16 = int_to_ptr.vmem [resolvable:$true] %s15
      %21 = dma.hbm_to_vmem [thread:$0]  %s0, 512, %s16, [#allocation3], 256, 256, 16
    $region5: #{_class_forward.1} parent=1 // pred_fallthru
      _
    // Predicated region
    $region6: #{_class_forward.1} parent=1 // pred_check
      _
    $region7: #{_class_forward.1} parent=1 // pred_check_branch
      %23 = sbr.rel (0) target = $region9
    $region8: #{_class_forward.1} parent=1 // pred_region
      %s25 = ssub.s32 4096, 4096
      %26 = vsyncadd [#allocation6], %s25
      %s27 = sshll.u32 [#allocation5], 4
      %s28 = int_to_ptr.vmem [resolvable:$true] %s27
      %33 = dma.hbm_to_vmem [thread:$0]  %s1, 4096, %s28, [#allocation6], 256, 256, 16
    $region9: #{_class_forward.1} parent=1 // pred_fallthru
      _
    // Predicated region
    $region10: #{_class_forward.1} parent=1 // pred_check
      _
    $region11: #{_class_forward.1} parent=1 // pred_check_branch
      %35 = sbr.rel (0) target = $region13
    $region12: #{_class_forward.1} parent=1 // pred_region
      %36 = dma.done [#allocation3], 512
    $region13: #{_class_forward.1} parent=1 // pred_fallthru
      _
    // Predicated region
    $region14: #{_class_forward.1} parent=1 // pred_check
      _
    $region15: #{_class_forward.1} parent=1 // pred_check_branch
      %38 = sbr.rel (0) target = $region17
    $region16: #{_class_forward.1} parent=1 // pred_region
      %39 = dma.done [#allocation6], 4096
    $region17: #{_class_forward.1} parent=1 // pred_fallthru
      _
    %v40 = vld [vmem:[#allocation2] sm:$0xff]
    %v41 = vld [vmem:[#allocation2 + $0x8] sm:$0xff]
    %v42 = vld [vmem:[#allocation2 + $0x10] sm:$0xff]
    %v43 = vld [vmem:[#allocation2 + $0x18] sm:$0xff]
    %v44 = vld [vmem:[#allocation5] sm:$0xff]
    %v45 = vld [vmem:[#allocation5 + $0x8] sm:$0xff]
    %v46 = vld [vmem:[#allocation5 + $0x10] sm:$0xff]
    %v47 = vld [vmem:[#allocation5 + $0x18] sm:$0xff]
    %v48 = vld [vmem:[#allocation5 + $0x20] sm:$0xff]
    %v49 = vld [vmem:[#allocation5 + $0x28] sm:$0xff]
    %v50 = vld [vmem:[#allocation5 + $0x30] sm:$0xff]
    %v51 = vld [vmem:[#allocation5 + $0x38] sm:$0xff]
    %v52 = vld [vmem:[#allocation5 + $0x40] sm:$0xff]
    %v53 = vld [vmem:[#allocation5 + $0x48] sm:$0xff]
    %v54 = vld [vmem:[#allocation5 + $0x50] sm:$0xff]
    %v55 = vld [vmem:[#allocation5 + $0x58] sm:$0xff]
    %v56 = vld [vmem:[#allocation5 + $0x60] sm:$0xff]
    %v57 = vld [vmem:[#allocation5 + $0x68] sm:$0xff]
    %v58 = vld [vmem:[#allocation5 + $0x70] sm:$0xff]
    %v59 = vld [vmem:[#allocation5 + $0x78] sm:$0xff]
    %v60 = vld [vmem:[#allocation5 + $0x80] sm:$0xff]
    %v61 = vld [vmem:[#allocation5 + $0x88] sm:$0xff]
    %v62 = vld [vmem:[#allocation5 + $0x90] sm:$0xff]
    %v63 = vld [vmem:[#allocation5 + $0x98] sm:$0xff]
    %v64 = vld [vmem:[#allocation5 + $0xa0] sm:$0xff]
    %v65 = vld [vmem:[#allocation5 + $0xa8] sm:$0xff]
    %v66 = vld [vmem:[#allocation5 + $0xb0] sm:$0xff]
    %v67 = vld [vmem:[#allocation5 + $0xb8] sm:$0xff]
    %v68 = vld [vmem:[#allocation5 + $0xc0] sm:$0xff]
    %v69 = vld [vmem:[#allocation5 + $0xc8] sm:$0xff]
    %v70 = vld [vmem:[#allocation5 + $0xd0] sm:$0xff]
    %v71 = vld [vmem:[#allocation5 + $0xd8] sm:$0xff]
    %v72 = vld [vmem:[#allocation5 + $0xe0] sm:$0xff]
    %v73 = vld [vmem:[#allocation5 + $0xe8] sm:$0xff]
    %v74 = vld [vmem:[#allocation5 + $0xf0] sm:$0xff]
    %v75 = vld [vmem:[#allocation5 + $0xf8] sm:$0xff]
    %76 = vmatprep.subr.mxu0 %v45
    %77 = vmatpush1.xpose.msra.mxu0 %v44
    %78 = vmatprep.subr.mxu0 %v47
    %79 = vmatpush1.xpose.msra.mxu0 %v46
    %80 = vmatprep.subr.mxu0 %v49
    %81 = vmatpush1.xpose.msra.mxu0 %v48
    %82 = vmatprep.subr.mxu0 %v51
    %83 = vmatpush1.xpose.msra.mxu0 %v50
    %84 = vmatprep.subr.mxu0 %v53
    %85 = vmatpush1.xpose.msra.mxu0 %v52
    %86 = vmatprep.subr.mxu0 %v55
    %87 = vmatpush1.xpose.msra.mxu0 %v54
    %88 = vmatprep.subr.mxu0 %v57
    %89 = vmatpush1.xpose.msra.mxu0 %v56
    %90 = vmatprep.subr.mxu0 %v59
    %91 = vmatpush1.xpose.msra.mxu0 %v58
    %92 = vmatprep.subr.mxu0 %v61
    %93 = vmatpush1.xpose.msra.mxu0 %v60
    %94 = vmatprep.subr.mxu0 %v63
    %95 = vmatpush1.xpose.msra.mxu0 %v62
    %96 = vmatprep.subr.mxu0 %v65
    %97 = vmatpush1.xpose.msra.mxu0 %v64
    %98 = vmatprep.subr.mxu0 %v67
    %99 = vmatpush1.xpose.msra.mxu0 %v66
    %100 = vmatprep.subr.mxu0 %v69
    %101 = vmatpush1.xpose.msra.mxu0 %v68
    %102 = vmatprep.subr.mxu0 %v71
    %103 = vmatpush1.xpose.msra.mxu0 %v70
    %104 = vmatprep.subr.mxu0 %v73
    %105 = vmatpush1.xpose.msra.mxu0 %v72
    %106 = vmatprep.subr.mxu0 %v75
    %107 = vmatpush1.xpose.msra.mxu0 %v74
    %108 = vmatprep.subr.mxu0 0.0
    %109 = vmatpush1.xpose.msra.mxu0 0.0
    %110 = vmatprep.subr.mxu0 0.0
    %111 = vmatpush1.xpose.msra.mxu0 0.0
    %112 = vmatprep.subr.mxu0 0.0
    %113 = vmatpush1.xpose.msra.mxu0 0.0
    %114 = vmatprep.subr.mxu0 0.0
    %115 = vmatpush1.xpose.msra.mxu0 0.0
    %116 = vmatprep.subr.mxu0 0.0
    %117 = vmatpush1.xpose.msra.mxu0 0.0
    %118 = vmatprep.subr.mxu0 0.0
    %119 = vmatpush1.xpose.msra.mxu0 0.0
    %120 = vmatprep.subr.mxu0 0.0
    %121 = vmatpush1.xpose.msra.mxu0 0.0
    %122 = vmatprep.subr.mxu0 0.0
    %123 = vmatpush1.xpose.msra.mxu0 0.0
    %124 = vmatprep.subr.mxu0 0.0
    %125 = vmatpush1.xpose.msra.mxu0 0.0
    %126 = vmatprep.subr.mxu0 0.0
    %127 = vmatpush1.xpose.msra.mxu0 0.0
    %128 = vmatprep.subr.mxu0 0.0
    %129 = vmatpush1.xpose.msra.mxu0 0.0
    %130 = vmatprep.subr.mxu0 0.0
    %131 = vmatpush1.xpose.msra.mxu0 0.0
    %132 = vmatprep.subr.mxu0 0.0
    %133 = vmatpush1.xpose.msra.mxu0 0.0
    %134 = vmatprep.subr.mxu0 0.0
    %135 = vmatpush1.xpose.msra.mxu0 0.0
    %136 = vmatprep.subr.mxu0 0.0
    %137 = vmatpush1.xpose.msra.mxu0 0.0
    %138 = vmatprep.subr.mxu0 0.0
    %139 = vmatpush1.xpose.msra.mxu0 0.0
    %140 = vmatprep.mubr.f32.mxu0 %v41
    %141 = vmatmul.mubr.f32.gmra.mrb[0].mxu0 %v40
    %v142 = vpop.f32.mrb[0].mxu0
    %v143 = vadd.f32 0.0, %v142
    %v144 = vpop.f32.mrb[0].mxu0
    %145 = vmatprep.mubr.f32.mxu0 %v43
    %146 = vmatmul.mubr.f32.gmra.mrb[0].mxu0 %v42
    %v147 = vpop.f32.mrb[0].mxu0
    %v148 = vadd.f32 0.0, %v147
    %v149 = vpop.f32.mrb[0].mxu0
    %150 = vdwg.mxu0
    %151 = vst [vmem:[#allocation7] sm:$0xff] %v143
    %152 = vst [vmem:[#allocation7 + $0x8] sm:$0xff] %v148
    // Predicated region
    $region18: #{_class_forward.1} parent=1 // pred_check
      _
    $region19: #{_class_forward.1} parent=1 // pred_check_branch
      %154 = sbr.rel (0) target = $region21
    $region20: #{_class_forward.1} parent=1 // pred_region
      %s156 = ssub.s32 256, 256
      %157 = vsyncadd [#allocation4], %s156
      %s158 = sshll.u32 [#allocation7], 4
      %s159 = int_to_ptr.vmem [resolvable:$true] %s158
      %164 = dma.vmem_to_hbm [thread:$0]  %s159, 256, %s2, [#allocation4], 128, 128, 8
    $region21: #{_class_forward.1} parent=1 // pred_fallthru
      _
    // Predicated region
    $region22: #{_class_forward.1} parent=1 // pred_check
      _
    $region23: #{_class_forward.1} parent=1 // pred_check_branch
      %166 = sbr.rel (0) target = $region25
    $region24: #{_class_forward.1} parent=1 // pred_region
      %167 = dma.done [#allocation4], 256
    $region25: #{_class_forward.1} parent=1 // pred_fallthru
      _
    %168 = vsyncpa [#allocation3], 1
    %169 = vsyncpa [#allocation6], 1
    %170 = vsyncpa [#allocation4], 1

</llo_original>
